<compile_context>
chip_gen: v6e
topology: v6e:2x2x1
jax: 0.10.0
libtpu: 0.0.40
codegen_flags: <defaults>
</compile_context>

<pallas_src>
import jax
import jax.numpy as jnp
from jax.experimental import pallas as pl
from jax.experimental.pallas import tpu as pltpu

MAX_TM = 2048   # batch-tile cap: x tile (TM rows, lane-padded) ~1 MiB f32 at 2048


def _round_up(x, m):
    return ((x + m - 1) // m) * m


def mlp_kernel(x_ref, w1_ref, p_ref, b2_ref, o_ref):
    """x_ref : (TM, F)  f32 or bf16 (same dtype as w1_ref)
       w1_ref: (F, H)   f32 or bf16
       p_ref : (2, H)   f32  rows = [b1 ; w2_row]
       b2_ref: (1,)     f32  scalar bias in SMEM
       o_ref : (TM, 1)  f32
    """
    # Layer 1 on the MXU: relu(x @ W1 + b1), f32 accumulation.
    h = jnp.dot(x_ref[...], w1_ref[...], preferred_element_type=jnp.float32)
    h = jnp.maximum(h + p_ref[0:1, :], 0.0)                   # (TM, H) f32

    # Layer 2 (n_output == 1): VPU elementwise multiply + XLU lane reduction
    # instead of a 1-column MXU matmul; scalar bias comes from SMEM.
    y = jnp.sum(h * p_ref[1:2, :], axis=-1, keepdims=True)    # (TM, 1) f32
    o_ref[...] = (y + b2_ref[0]).astype(o_ref.dtype)          # compact store


def prepare_params(w1, b1, w2, b2, compute_dtype=jnp.float32):
    """One-time (outside the per-call path) repack of PyTorch-style params.

    w1: (n_hidden, n_feature), b1: (n_hidden,), w2: (1, n_hidden), b2: (1,)
    Returns:
      w1_t   : (n_feature, n_hidden) in `compute_dtype` (f32 or bf16)
      params : (2, n_hidden) f32, rows = [b1, w2_row]   (post-MXU math stays f32)
      b2_s   : (1,) f32 scalar for SMEM
    """
    w1_t = jnp.transpose(w1).astype(compute_dtype)
    params = jnp.stack(
        [b1.astype(jnp.float32), w2[0].astype(jnp.float32)], axis=0)
    b2_s = jnp.reshape(b2, (1,)).astype(jnp.float32)
    return w1_t, params, b2_s


def _choose_tile(B):
    """Batch tile: whole batch if tiny, else an even >=2-step grid (v7x
    megacore) with tiles that are multiples of 8 and <= MAX_TM."""
    if B <= 8:
        return B
    steps = pl.cdiv(B, MAX_TM)
    steps = max(2, steps + (steps % 2))           # even, >= 2 grid steps
    return min(MAX_TM, _round_up(pl.cdiv(B, steps), 8))


@jax.jit
def net_forward(x, w1_t, params, b2_s):
    """x: (B, n_feature). Returns (B, 1) = predict(relu(hidden(x)))."""
    B, n_feature = x.shape
    n_hidden = w1_t.shape[1]
    x = x.astype(w1_t.dtype)      # bf16 input path on v6e/v7x if requested

    TM = _choose_tile(B)
    grid = (pl.cdiv(B, TM),)

    return pl.pallas_call(
        mlp_kernel,
        out_shape=jax.ShapeDtypeStruct((B, 1), jnp.float32),
        grid_spec=pltpu.PrefetchScalarGridSpec(
            num_scalar_prefetch=0,
            grid=grid,
            in_specs=[
                pl.BlockSpec((TM, n_feature), lambda i: (i, 0)),        # x tile
                pl.BlockSpec((n_feature, n_hidden), lambda i: (0, 0)),  # W1
                pl.BlockSpec((2, n_hidden), lambda i: (0, 0)),          # b1, w2
                pl.BlockSpec(memory_space=pltpu.MemorySpace.SMEM),      # b2 scalar
            ],
            out_specs=pl.BlockSpec((TM, 1), lambda i: (i, 0)),          # (B,1) out
        ),
        compiler_params=pltpu.CompilerParams(
            dimension_semantics=("parallel",),      # shard batch across TCs
            vmem_limit_bytes=32 * 1024 * 1024,      # v5e scoped default is 16 MiB
        ),
    )(x, w1_t, params, b2_s)


if __name__ == "__main__":
    # Small shapes consistent with the module's forward pass (n_output = 1).
    n_feature, n_hidden, n_output = 4, 32, 1

    key = jax.random.PRNGKey(0)
    k_x, k_x2, k_w1, k_b1, k_w2, k_b2 = jax.random.split(key, 6)

    # Deterministic parameter init (mimics PyTorch Linear's uniform range).
    bound1 = 1.0 / (n_feature ** 0.5)
    w1 = jax.random.uniform(k_w1, (n_hidden, n_feature), jnp.float32, -bound1, bound1)
    b1 = jax.random.uniform(k_b1, (n_hidden,), jnp.float32, -bound1, bound1)
    bound2 = 1.0 / (n_hidden ** 0.5)
    w2 = jax.random.uniform(k_w2, (n_output, n_hidden), jnp.float32, -bound2, bound2)
    b2 = jax.random.uniform(k_b2, (n_output,), jnp.float32, -bound2, bound2)

    def reference(xv):
        h = jnp.maximum(
            jnp.dot(xv, w1.T, precision=jax.lax.Precision.HIGHEST) + b1, 0.0)
        return jnp.dot(h, w2.T, precision=jax.lax.Precision.HIGHEST) + b2

    # ---- f32 path: exact-dtype match with the f32 PyTorch module ----
    w1_t, params, b2_s = prepare_params(w1, b1, w2, b2, compute_dtype=jnp.float32)

    B = 8
    x = jax.random.normal(k_x, (B, n_feature), dtype=jnp.float32)
    y = net_forward(x, w1_t, params, b2_s)
    jax.block_until_ready(y)
    assert y.shape == (B, n_output)
    assert jnp.allclose(y, reference(x), atol=1e-4, rtol=1e-4)

    # Larger batch: exercises the even >=2-step "parallel" grid and a
    # partial last tile (B=300, TM=152 -> grid=(2,)).
    B2 = 300
    x2 = jax.random.normal(k_x2, (B2, n_feature), dtype=jnp.float32)
    y2 = net_forward(x2, w1_t, params, b2_s)
    jax.block_until_ready(y2)
    assert y2.shape == (B2, n_output)
    assert jnp.allclose(y2, reference(x2), atol=1e-4, rtol=1e-4)

    # ---- optional bf16 input path (halves dominant HBM read on v6e/v7x);
    # MXU accumulation and all post-MXU math remain f32 (v5e-safe). ----
    w1_bf, params_bf, b2_bf = prepare_params(w1, b1, w2, b2,
                                             compute_dtype=jnp.bfloat16)
    y_bf = net_forward(x2, w1_bf, params_bf, b2_bf)
    jax.block_until_ready(y_bf)
    assert y_bf.shape == (B2, n_output)
    assert jnp.allclose(y_bf, reference(x2), atol=5e-2, rtol=5e-2)

    print("KERNEL_OK")
</pallas_src>

<mosaic_0001>
module attributes {stable_mosaic.version = 11 : i64} {
  func.func @mlp_kernel(%arg0: i32, %arg1: memref<8x4xf32, #tpu.memory_space<vmem>>, %arg2: memref<4x32xf32, #tpu.memory_space<vmem>>, %arg3: memref<2x32xf32, #tpu.memory_space<vmem>>, %arg4: memref<1xf32, #tpu.memory_space<smem>>, %arg5: memref<8x1xf32, #tpu.memory_space<vmem>>) attributes {dimension_semantics = [#tpu.dimension_semantics<parallel>], iteration_bounds = array<i64: 1>, scalar_prefetch = 0 : i64, scratch_operands = 0 : i64, tpu.core_type = #tpu.core_type<tc>, window_params = [{transform_indices = @transform_0, window_bounds = array<i64: 8, 4>}, {pipeline_mode = #tpu.pipeline_mode<synchronous>, transform_indices = @transform_1, window_bounds = array<i64: 4, 32>}, {pipeline_mode = #tpu.pipeline_mode<synchronous>, transform_indices = @transform_2, window_bounds = array<i64: 2, 32>}, {transform_indices = @transform_3, window_bounds = array<i64: 1>}, {transform_indices = @transform_4, window_bounds = array<i64: 8, 1>}]} {
    %c0 = arith.constant 0 : index
    %c0_0 = arith.constant 0 : index
    %0 = vector.load %arg1[%c0, %c0_0] : memref<8x4xf32, #tpu.memory_space<vmem>>, vector<8x4xf32>
    %c0_1 = arith.constant 0 : index
    %c0_2 = arith.constant 0 : index
    %1 = vector.load %arg2[%c0_1, %c0_2] : memref<4x32xf32, #tpu.memory_space<vmem>>, vector<4x32xf32>
    %cst = arith.constant dense<0.000000e+00> : vector<8x32xf32>
    %2 = tpu.matmul %0, %1, %cst {dimension_numbers = #tpu.dot_dimension_numbers<[1], [0], [0], [1], [0, 0, 1, 1], [], []>} : vector<8x4xf32>, vector<4x32xf32>, vector<8x32xf32> -> vector<8x32xf32>
    %c0_3 = arith.constant 0 : index
    %c0_4 = arith.constant 0 : index
    %3 = vector.load %arg3[%c0_3, %c0_4] : memref<2x32xf32, #tpu.memory_space<vmem>>, vector<1x32xf32>
    %4 = vector.broadcast %3 : vector<1x32xf32> to vector<8x32xf32>
    %5 = arith.addf %2, %4 : vector<8x32xf32>
    %cst_5 = arith.constant 0.000000e+00 : f32
    %6 = vector.broadcast %cst_5 : f32 to vector<8x32xf32>
    %7 = arith.maximumf %5, %6 : vector<8x32xf32>
    %c1 = arith.constant 1 : index
    %c0_6 = arith.constant 0 : index
    %8 = vector.load %arg3[%c1, %c0_6] : memref<2x32xf32, #tpu.memory_space<vmem>>, vector<1x32xf32>
    %9 = vector.broadcast %8 : vector<1x32xf32> to vector<8x32xf32>
    %10 = arith.mulf %7, %9 : vector<8x32xf32>
    %cst_7 = arith.constant dense<0.000000e+00> : vector<8xf32>
    %11 = vector.multi_reduction <add>, %10, %cst_7 [1] : vector<8x32xf32> to vector<8xf32>
    %12 = vector.shape_cast %11 : vector<8xf32> to vector<8x1xf32>
    %c0_8 = arith.constant 0 : index
    %13 = memref.load %arg4[%c0_8] : memref<1xf32, #tpu.memory_space<smem>>
    %14 = vector.broadcast %13 : f32 to vector<8x1xf32>
    %15 = arith.addf %12, %14 : vector<8x1xf32>
    %c0_9 = arith.constant 0 : index
    %c0_10 = arith.constant 0 : index
    %16 = vector.load %arg5[%c0_9, %c0_10] : memref<8x1xf32, #tpu.memory_space<vmem>>, vector<8x1xf32>
    tpu.vector_store %arg5[%c0_9, %c0_10], %15 {strides = array<i32>} : memref<8x1xf32, #tpu.memory_space<vmem>>, vector<8x1xf32>,
    return
  }
  func.func @transform_0(%arg0: i32) -> (i32, i32) {
    %c0_i32 = arith.constant 0 : i32
    %c0_i32_0 = arith.constant 0 : i32
    return %arg0, %c0_i32 : i32, i32
  }
  func.func @transform_1(%arg0: i32) -> (i32, i32) {
    %c0_i32 = arith.constant 0 : i32
    %c0_i32_0 = arith.constant 0 : i32
    %c0_i32_1 = arith.constant 0 : i32
    return %c0_i32, %c0_i32_0 : i32, i32
  }
  func.func @transform_2(%arg0: i32) -> (i32, i32) {
    %c0_i32 = arith.constant 0 : i32
    %c0_i32_0 = arith.constant 0 : i32
    %c0_i32_1 = arith.constant 0 : i32
    return %c0_i32, %c0_i32_0 : i32, i32
  }
  func.func @transform_3(%arg0: i32) -> i32 {
    %c0_i32 = arith.constant 0 : i32
    %c0_i32_0 = arith.constant 0 : i32
    return %c0_i32 : i32
  }
  func.func @transform_4(%arg0: i32) -> (i32, i32) {
    %c0_i32 = arith.constant 0 : i32
    %c0_i32_0 = arith.constant 0 : i32
    return %arg0, %c0_i32 : i32, i32
  }
}

</mosaic_0001>

<llo_original>
// kernel: net_forward.1
$region0: #{net_forward.1}
  #allocation0 [shape = 'u32[]', space=smem, size = 0x4, offset = 0x4, fixed_abs, tag = 'smem constant byte address 0x4 - core index']
  #allocation1 [shape = 'u32[144,128]{1,0:T(1,128)}', space=vmem, size = 0x12000, scoped, tag = 'internal scratch']
  #allocation2 [shape = 'f32[1]{0:T(128)S(6)}', space=smem, size = 0x200, scoped, tag = 'scoped memory for net_forward.1']
  %s0 = inlined_call_operand.vmem [shape: f32[8,4], index: 0, kind: input, shape index: {}]
  %s1 = inlined_call_operand.vmem [shape: f32[4,32], index: 1, kind: input, shape index: {}]
  %s2 = inlined_call_operand.vmem [shape: f32[2,32], index: 2, kind: input, shape index: {}]
  %s3 = inlined_call_operand.<no memory space> [shape: f32[1], index: 3, kind: input, shape index: {}]
  %s4 = inlined_call_operand.vmem [shape: f32[8,1], index: 4, kind: output, shape index: {}]
  %s5 = sld [smem:[#allocation0]]
  $region26: #{net_forward.1} parent=0
    _
  %s7 = ssub.s32 1, %s5
  %s8 = scalar_select 0, %s7, %s5
  %9 = sst [smem:[#allocation2]] %s3
  // Predicated region
  $region2: #{net_forward.1} parent=0 // pred_check
    _
  $region3: #{net_forward.1} parent=0 // pred_check_branch
    %11 = sbr.rel (0) target = $region5
  $region4: #{net_forward.1} parent=0 // pred_region
    _
  $region5: #{net_forward.1} parent=0 // pred_fallthru
    _
  // Predicated region
  $region6: #{net_forward.1} parent=0 // pred_check
    _
  $region7: #{net_forward.1} parent=0 // pred_check_branch
    %13 = sbr.rel (0) target = $region9
  $region8: #{net_forward.1} parent=0 // pred_region
    _
  $region9: #{net_forward.1} parent=0 // pred_fallthru
    _
  // Predicated region
  $region10: #{net_forward.1} parent=0 // pred_check
    _
  $region11: #{net_forward.1} parent=0 // pred_check_branch
    %15 = sbr.rel (0) target = $region13
  $region12: #{net_forward.1} parent=0 // pred_region
    _
  $region13: #{net_forward.1} parent=0 // pred_fallthru
    _
  // Predicated region
  $region14: #{net_forward.1} parent=0 // pred_check
    _
  $region15: #{net_forward.1} parent=0 // pred_check_branch
    %17 = sbr.rel (0) target = $region17
  $region16: #{net_forward.1} parent=0 // pred_region
    _
  $region17: #{net_forward.1} parent=0 // pred_fallthru
    _
  %v18 = vld [vmem:[%s0] sm:$0xff]
  %v19 = vld [vmem:[%s1] sm:$0xf]
  %v20 = vld [vmem:[%s2] sm:$0x1]
  %v21 = vlaneseq
  %v22 = vshrl.u32 %v21, 7
  %v23 = vsub.s32 0, %v22
  %v24 = vrot.slane %v20, %v23
  %vm25 = vcmask 31744
  %v27 = vsel %vm25, %v18, 0
  %vm29 = vcmask 1043456
  %v31 = vsel %vm29, %v19, 0
  %33 = vmatprep.subr.mxu0 0.0
  %34 = vmatpush1.msra.mxu0 0.0
  %35 = vmatprep.subr.mxu0 0.0
  %36 = vmatpush1.msra.mxu0 0.0
  %37 = vmatprep.subr.mxu0 0.0
  %38 = vmatpush1.msra.mxu0 0.0
  %39 = vmatprep.subr.mxu0 0.0
  %40 = vmatpush1.msra.mxu0 0.0
  %41 = vmatprep.subr.mxu0 0.0
  %42 = vmatpush1.msra.mxu0 0.0
  %43 = vmatprep.subr.mxu0 0.0
  %44 = vmatpush1.msra.mxu0 0.0
  %45 = vmatprep.subr.mxu0 0.0
  %46 = vmatpush1.msra.mxu0 0.0
  %47 = vmatprep.subr.mxu0 0.0
  %48 = vmatpush1.msra.mxu0 0.0
  %49 = vmatprep.subr.mxu0 0.0
  %50 = vmatpush1.msra.mxu0 0.0
  %51 = vmatprep.subr.mxu0 0.0
  %52 = vmatpush1.msra.mxu0 0.0
  %53 = vmatprep.subr.mxu0 0.0
  %54 = vmatpush1.msra.mxu0 0.0
  %55 = vmatprep.subr.mxu0 0.0
  %56 = vmatpush1.msra.mxu0 0.0
  %57 = vmatprep.subr.mxu0 0.0
  %58 = vmatpush1.msra.mxu0 0.0
  %59 = vmatprep.subr.mxu0 0.0
  %60 = vmatpush1.msra.mxu0 0.0
  %61 = vmatprep.subr.mxu0 0.0
  %62 = vmatpush1.msra.mxu0 0.0
  %63 = vmatprep.subr.mxu0 0.0
  %64 = vmatpush1.msra.mxu0 %v31
  %65 = vmatprep.subr.mxu0 0.0
  %66 = vmatpush2.msra.mxu0 0.0
  %67 = vmatprep.subr.mxu0 0.0
  %68 = vmatpush2.msra.mxu0 0.0
  %69 = vmatprep.subr.mxu0 0.0
  %70 = vmatpush2.msra.mxu0 0.0
  %71 = vmatprep.subr.mxu0 0.0
  %72 = vmatpush2.msra.mxu0 0.0
  %73 = vmatprep.subr.mxu0 0.0
  %74 = vmatpush2.msra.mxu0 0.0
  %75 = vmatprep.subr.mxu0 0.0
  %76 = vmatpush2.msra.mxu0 0.0
  %77 = vmatprep.subr.mxu0 0.0
  %78 = vmatpush2.msra.mxu0 0.0
  %79 = vmatprep.subr.mxu0 0.0
  %80 = vmatpush2.msra.mxu0 0.0
  %81 = vmatprep.subr.mxu0 0.0
  %82 = vmatpush2.msra.mxu0 0.0
  %83 = vmatprep.subr.mxu0 0.0
  %84 = vmatpush2.msra.mxu0 0.0
  %85 = vmatprep.subr.mxu0 0.0
  %86 = vmatpush2.msra.mxu0 0.0
  %87 = vmatprep.subr.mxu0 0.0
  %88 = vmatpush2.msra.mxu0 0.0
  %89 = vmatprep.subr.mxu0 0.0
  %90 = vmatpush2.msra.mxu0 0.0
  %91 = vmatprep.subr.mxu0 0.0
  %92 = vmatpush2.msra.mxu0 0.0
  %93 = vmatprep.subr.mxu0 0.0
  %94 = vmatpush2.msra.mxu0 0.0
  %95 = vmatprep.subr.mxu0 0.0
  %96 = vmatpush2.msra.mxu0 0.0
  %97 = vmatprep.mubr.f32.mxu0 0.0
  %98 = vmatmul.mubr.f32.gmra.mxu0 %v27
  %v99 = vpop.f32.mrf.mxu0
  %v100 = vadd.f32 %v24, %v99
  %v101 = vpop.f32.mrf.mxu0
  %102 = vdwg.mxu0
  %v103 = vmax.f32 %v100, 0.0
  %v104 = vld [vmem:[%s2 + $0x1] sm:$0x1]
  %v105 = vlaneseq
  %v106 = vshrl.u32 %v105, 7
  %v107 = vsub.s32 0, %v106
  %v108 = vrot.slane %v104, %v107
  %v109 = vmul.f32 %v103, %v108
  %vm110 = vcmask 261120
  %v111 = vsel %vm110, %v109, 0.0
  %112 = vadd.xlane.f32.xlu0 %v111
  %v113 = vpop.xlane.xlu0 %112
  %s114 = sld [smem:[#allocation2]]
  %v115 = vstv %s114
  %v116 = vadd.f32 %v113, %v115
  %vm117 = vcmask 7168
  %118 = vst.msk [vmem:[%s4] sm:$0xff] %vm117, %v116
  // Predicated region
  $region18: #{net_forward.1} parent=0 // pred_check
    _
  $region19: #{net_forward.1} parent=0 // pred_check_branch
    %120 = sbr.rel (0) target = $region21
  $region20: #{net_forward.1} parent=0 // pred_region
    _
  $region21: #{net_forward.1} parent=0 // pred_fallthru
    _
  // Predicated region
  $region22: #{net_forward.1} parent=0 // pred_check
    _
  $region23: #{net_forward.1} parent=0 // pred_check_branch
    %122 = sbr.rel (0) target = $region25
  $region24: #{net_forward.1} parent=0 // pred_region
    _
  $region25: #{net_forward.1} parent=0 // pred_fallthru
    _

</llo_original>
